<compile_context>
chip_gen: v5e
topology: v5e:2x2
jax: 0.10.0
libtpu: 0.0.40
codegen_flags: <defaults>
</compile_context>

<pallas_src>
import functools

import jax
import jax.numpy as jnp
from jax import lax
from jax.experimental import pallas as pl
from jax.experimental.pallas import tpu as pltpu


# ----------------------------------------------------------------------------
# Pooling:  Permute() -> AdaptiveAvg/MaxPool1d(1) -> Squeeze(-1) over
# torch.cat([atom_rep, frag_rep], dim=1), as a tiled fused reduction.
# Grid = (batch tiles "parallel", atom-seq tiles + frag-seq tiles "arbitrary");
# the output block is the accumulator (init at j==0, finalize at the last j).
# ----------------------------------------------------------------------------
def _pool_kernel(a_ref, f_ref, o_ref, *, mode, n_a, n_seq, La, Lf, Lta, Ltf, denom):
    j = pl.program_id(1)

    @pl.when(j == 0)
    def _():
        if mode == "avg":
            o_ref[...] = jnp.zeros(o_ref.shape, o_ref.dtype)
        else:
            o_ref[...] = jnp.full(o_ref.shape, -jnp.inf, o_ref.dtype)

    def reduce_block(x_ref, seq_len, tile, jj):
        x = x_ref[...].astype(jnp.float32)
        if seq_len % tile != 0:
            # masked tail tile: positions past seq_len are OOB garbage -> neutralize.
            pos = jj * tile + lax.broadcasted_iota(
                jnp.int32, (x.shape[0], x.shape[1], 1), 1)
            valid = pos < seq_len
            x = jnp.where(valid, x, 0.0 if mode == "avg" else -jnp.inf)
        if mode == "avg":
            o_ref[...] += jnp.sum(x, axis=1)
        else:
            o_ref[...] = jnp.maximum(o_ref[...], jnp.max(x, axis=1))

    @pl.when(j < n_a)
    def _():
        reduce_block(a_ref, La, Lta, j)

    @pl.when(j >= n_a)
    def _():
        reduce_block(f_ref, Lf, Ltf, j - n_a)

    if mode == "avg":
        @pl.when(j == n_seq - 1)
        def _():
            o_ref[...] *= (1.0 / denom)


def _pool_tiles(B, La, Lf, H, max_seq_tile=None):
    """VMEM-budget-aware tile selection (2 inputs x 2 pipeline buffers must fit)."""
    try:
        vmem_bytes = int(pltpu.get_tpu_info().vmem_capacity_bytes)
    except Exception:  # pragma: no cover - conservative fallback
        vmem_bytes = 64 * 1024 * 1024
    budget = min(vmem_bytes // 8, 16 * 1024 * 1024)
    Bt = min(B, 8)
    max_lt = max(8, (budget // (2 * 2 * Bt * H * 4)) // 8 * 8)
    if max_seq_tile is not None:
        max_lt = min(max_lt, max(8, (max_seq_tile // 8) * 8))

    def tile(L):
        # whole sequence when it fits (always a legal block); otherwise 8-multiple
        # tiles with a masked tail.
        return L if L <= max_lt else max_lt

    return Bt, tile(La), tile(Lf)


def pooled_embed(atom_rep, frag_rep, mode="avg", max_seq_tile=None):
    B, La, H = atom_rep.shape
    _, Lf, _ = frag_rep.shape
    Bt, Lta, Ltf = _pool_tiles(B, La, Lf, H, max_seq_tile)
    n_a, n_f = pl.cdiv(La, Lta), pl.cdiv(Lf, Ltf)
    n_seq = n_a + n_f

    kernel = functools.partial(_pool_kernel, mode=mode, n_a=n_a, n_seq=n_seq,
                               La=La, Lf=Lf, Lta=Lta, Ltf=Ltf,
                               denom=float(La + Lf))
    return pl.pallas_call(
        kernel,
        out_shape=jax.ShapeDtypeStruct((B, H), jnp.float32),
        grid=(pl.cdiv(B, Bt), n_seq),
        in_specs=[
            # block indices are clamped while the other input is active; pl.when gates use.
            pl.BlockSpec((Bt, Lta, H), lambda i, j: (i, jnp.minimum(j, n_a - 1), 0)),
            pl.BlockSpec((Bt, Ltf, H), lambda i, j: (i, jnp.maximum(j - n_a, 0), 0)),
        ],
        out_specs=pl.BlockSpec((Bt, H), lambda i, j: (i, 0)),
        compiler_params=pltpu.CompilerParams(
            dimension_semantics=("parallel", "arbitrary"),
            vmem_limit_bytes=32 * 1024 * 1024),
    )(atom_rep, frag_rep)


# ----------------------------------------------------------------------------
# Fused Node_GRU readout: bidirectional GRU over atoms + frags, last timestep of the
# output, concat, projection — one pallas_call with a size-2 "parallel" grid axis
# (program 0 = atom stream, program 1 = frag stream; on v7x they map to the 2 TCs).
#
# PyTorch GRU cell:
#   r = sigmoid(x Wir + bir + h Whr + bhr); z = sigmoid(x Wiz + biz + h Whz + bhz)
#   n = tanh(x Win + bin + r * (h Whn + bhn));  h' = (1 - z) n + z h
# ----------------------------------------------------------------------------
def _gru_stream(x_ref, wi_ref, wh_ref, bi_ref, bhn_f_ref, bhn_r_ref,
                pf_ref, pbw_ref, xg_ref, *, Hp):
    """One stream (atom or frag): bidirectional readout + its half of the projection."""
    B, L, H = x_ref.shape
    f32, bf16 = jnp.float32, jnp.bfloat16
    G = 3 * Hp

    # Batched input projection for BOTH directions in one MXU matmul:
    #   (B*L, H) x (H, 6Hp) -> forward gates for every step + reverse gates (only t=L-1
    #   is ever used).  bhr / bhz are pre-folded into bi; only bhn is needed in the loop.
    x2d = x_ref[...].reshape(B * L, H).astype(bf16)
    xg_all = (jnp.dot(x2d, wi_ref[...], preferred_element_type=f32)
              + bi_ref[...]).reshape(B, L, 2 * G)

    xg_ref[...] = xg_all[:, :, :G]        # forward-direction gates -> VMEM scratch
    xg_rev = xg_all[:, L - 1, G:]         # (B, 3Hp) reverse-direction gates at last step

    wh = wh_ref[...]                                      # (Hp, 3Hp) bf16
    bhn_f = jnp.broadcast_to(bhn_f_ref[...], (B, Hp))     # hoisted out of the loop

    # t = 0: h0 == 0, so the recurrent matmul and the z*h term vanish.
    xg0 = xg_ref[:, 0, :]
    r = jax.nn.sigmoid(xg0[:, :Hp])
    z = jax.nn.sigmoid(xg0[:, Hp:2 * Hp])
    n = jnp.tanh(xg0[:, 2 * Hp:] + r * bhn_f)
    h = (1.0 - z) * n

    # Serial recurrence: one fused (B,Hp)x(Hp,3Hp) matmul per step; every gate slice is
    # 128-lane aligned (Hp=384) and xg is a single contiguous scratch read per step.
    for t in range(1, L):                 # tiny static trip count -> full unroll
        xg = xg_ref[:, t, :]
        hg = jnp.dot(h.astype(bf16), wh, preferred_element_type=f32)
        r = jax.nn.sigmoid(xg[:, :Hp] + hg[:, :Hp])
        z = jax.nn.sigmoid(xg[:, Hp:2 * Hp] + hg[:, Hp:2 * Hp])
        n = jnp.tanh(xg[:, 2 * Hp:] + r * (hg[:, 2 * Hp:] + bhn_f))
        h = (1.0 - z) * n + z * h
    # TODO(synk): for long sequences switch to lax.fori_loop(..., unroll=4..8) and a
    # bf16 xg scratch to bound instruction-memory / VMEM growth.

    # Reverse direction's output[:, -1] is a single GRU cell step from h0 = 0
    # (its recurrent matmul vanishes entirely; only bhn survives).
    bhn_r = jnp.broadcast_to(bhn_r_ref[...], (B, Hp))
    rr = jax.nn.sigmoid(xg_rev[:, :Hp])
    zr = jax.nn.sigmoid(xg_rev[:, Hp:2 * Hp])
    nr = jnp.tanh(xg_rev[:, 2 * Hp:] + rr * bhn_r)
    h_bwd = (1.0 - zr) * nr

    # Concat-free half projection: [h_fwd | h_bwd] @ proj == h_fwd @ Pf + h_bwd @ Pb.
    return (jnp.dot(h.astype(bf16), pf_ref[...], preferred_element_type=f32)
            + jnp.dot(h_bwd.astype(bf16), pbw_ref[...], preferred_element_type=f32))


def _node_gru_kernel(atom_ref, frag_ref,
                     a_wi, a_wh, a_bi, a_bhnf, a_bhnr, a_pf, a_pb,
                     f_wi, f_wh, f_bi, f_bhnf, f_bhnr, f_pf, f_pb,
                     projb_ref, o_ref, xg_a_ref, xg_f_ref, *, Hp):
    pid = pl.program_id(0)

    @pl.when(pid == 0)
    def _():
        out = _gru_stream(atom_ref, a_wi, a_wh, a_bi, a_bhnf, a_bhnr,
                          a_pf, a_pb, xg_a_ref, Hp=Hp)
        o_ref[0] = out.astype(o_ref.dtype)

    @pl.when(pid == 1)
    def _():
        out = _gru_stream(frag_ref, f_wi, f_wh, f_bi, f_bhnf, f_bhnr,
                          f_pf, f_pb, xg_f_ref, Hp=Hp)
        o_ref[0] = (out + projb_ref[...]).astype(o_ref.dtype)


def node_gru_forward(atom_rep, frag_rep, kp, hid_dim, Hp):
    B, La, _ = atom_rep.shape
    Lf = frag_rep.shape[1]

    def full_spec(shape):
        return pl.BlockSpec(shape, lambda p, _z=(0,) * len(shape): _z)

    sa, sf = kp["atom"], kp["frag"]
    args = [atom_rep, frag_rep]
    for s in (sa, sf):
        args += [s["wi"], s["wh"], s["bi"], s["bhn_f"], s["bhn_r"], s["p_f"], s["p_b"]]
    args.append(kp["proj_b"])

    partials = pl.pallas_call(
        functools.partial(_node_gru_kernel, Hp=Hp),
        out_shape=jax.ShapeDtypeStruct((2, B, hid_dim), jnp.float32),
        grid=(2,),
        in_specs=[full_spec(a.shape) for a in args],
        out_specs=pl.BlockSpec((1, B, hid_dim), lambda p: (p, 0, 0)),
        scratch_shapes=[
            pltpu.VMEM((B, La, 3 * Hp), jnp.float32),   # projected atom forward gates
            pltpu.VMEM((B, Lf, 3 * Hp), jnp.float32),   # projected frag forward gates
        ],
        compiler_params=pltpu.CompilerParams(
            dimension_semantics=("parallel",),
            vmem_limit_bytes=32 * 1024 * 1024),
    )(*args)
    # Tiny per-stream projection halves combined in the wrapper (4.8 KB round-trip).
    return partials[0] + partials[1]


# ----------------------------------------------------------------------------
# Parameter init / packing.  Logical parameters follow nn.GRU / nn.Linear shapes and
# stay f32 (used by the pure-JAX reference); the kernel operands are packed/padded to
# Hp=384-aligned gates and cast to bf16 (MXU operand dtype) once at construction time.
# ----------------------------------------------------------------------------
def _gru_dir_params(key, H, with_wh=True):
    scale = 1.0 / float(H) ** 0.5
    ks = jax.random.split(key, 4)
    u = lambda k, shape: jax.random.uniform(k, shape, jnp.float32, -scale, scale)
    p = dict(
        wi=u(ks[0], (H, 3 * H)),     # [Wir|Wiz|Win]
        bi=u(ks[2], (1, 3 * H)),     # [bir|biz|bin]
        bh=u(ks[3], (1, 3 * H)),     # [bhr|bhz|bhn]
    )
    if with_wh:
        p["wh"] = u(ks[1], (H, 3 * H))   # [Whr|Whz|Whn]
    return p


def _pack_node_gru_params(params, H, Hp):
    f32, bf16 = jnp.float32, jnp.bfloat16

    def pad_gates(w):            # (..., 3H) -> (..., 3Hp), each gate at an Hp-aligned offset
        out = jnp.zeros(w.shape[:-1] + (3 * Hp,), w.dtype)
        for g in range(3):
            out = out.at[..., g * Hp: g * Hp + H].set(w[..., g * H:(g + 1) * H])
        return out

    def pad_rows(w):             # (H, N) -> (Hp, N), padded rows zero
        return jnp.zeros((Hp, w.shape[1]), w.dtype).at[:H].set(w)

    def pad_lanes(v):            # (1, H) -> (1, Hp), padded lanes zero
        return jnp.zeros((1, Hp), v.dtype).at[:, :H].set(v)

    def fold(bi, bh):            # fold bhr/bhz into the input bias (purely additive there)
        return jnp.concatenate([bi[:, :2 * H] + bh[:, :2 * H], bi[:, 2 * H:]], axis=1)

    def stream(fwd, rev, p_fwd, p_bwd):
        return dict(
            wi=jnp.concatenate([pad_gates(fwd["wi"]), pad_gates(rev["wi"])],
                               axis=1).astype(bf16),                      # (H, 6Hp)
            wh=pad_rows(pad_gates(fwd["wh"])).astype(bf16),               # (Hp, 3Hp)
            bi=jnp.concatenate([pad_gates(fold(fwd["bi"], fwd["bh"])),
                                pad_gates(fold(rev["bi"], rev["bh"]))],
                               axis=1).astype(f32),                       # (1, 6Hp)
            bhn_f=pad_lanes(fwd["bh"][:, 2 * H:]).astype(f32),            # (1, Hp)
            bhn_r=pad_lanes(rev["bh"][:, 2 * H:]).astype(f32),            # (1, Hp)
            p_f=pad_rows(p_fwd).astype(bf16),                             # (Hp, H)
            p_b=pad_rows(p_bwd).astype(bf16),                             # (Hp, H)
        )

    pw = params["proj_w"]
    return dict(
        atom=stream(params["atom_fwd"], params["atom_rev"], pw[:H], pw[H:2 * H]),
        frag=stream(params["frag_fwd"], params["frag_rev"], pw[2 * H:3 * H], pw[3 * H:]),
        proj_b=params["proj_b"].astype(f32),
    )


class NodeGRUPallas:
    """Node_GRU readout: bidirectional GRU over atoms + frags, output[:, -1], projection."""

    def __init__(self, hid_dim=300, bidirectional=True, key=None):
        assert bidirectional, "reference module uses bidirectional=True"
        self.hid_dim = hid_dim
        self.Hp = ((hid_dim + 127) // 128) * 128
        key = jax.random.PRNGKey(42) if key is None else key
        ks = jax.random.split(key, 6)
        self.params = dict(
            atom_fwd=_gru_dir_params(ks[0], hid_dim, with_wh=True),
            # the reverse direction only contributes output[:, -1] via a single cell step
            # from h0=0, so its recurrent weight is mathematically unused -> not allocated.
            atom_rev=_gru_dir_params(ks[1], hid_dim, with_wh=False),
            frag_fwd=_gru_dir_params(ks[2], hid_dim, with_wh=True),
            frag_rev=_gru_dir_params(ks[3], hid_dim, with_wh=False),
        )
        scale = 1.0 / float(4 * hid_dim) ** 0.5
        self.params["proj_w"] = jax.random.uniform(
            ks[4], (4 * hid_dim, hid_dim), jnp.float32, -scale, scale)
        self.params["proj_b"] = jax.random.uniform(
            ks[5], (1, hid_dim), jnp.float32, -scale, scale)
        self.kernel_params = _pack_node_gru_params(self.params, hid_dim, self.Hp)

    def __call__(self, atom_rep, frag_rep):
        return node_gru_forward(atom_rep, frag_rep, self.kernel_params,
                                self.hid_dim, self.Hp)


class PepLandFeatureExtractorPallas:
    """Forward-pass head of PepLandFeatureExtractor over precomputed embeddings."""

    def __init__(self, hid_dim=300, pooling="avg", key=None):
        self.pooling = pooling
        self.gru = NodeGRUPallas(hid_dim=hid_dim, key=key) if pooling == "gru" else None

    def __call__(self, atom_rep, frag_rep, atom_index=None):
        if atom_index is not None:
            return atom_rep[:, jnp.asarray(atom_index)]          # [B, len(idx), H] glue gather
        if self.pooling in ("avg", "max"):
            return pooled_embed(atom_rep, frag_rep, mode=self.pooling)  # [B, H]
        if self.pooling == "gru":
            return self.gru(atom_rep, frag_rep)                  # [B, H]
        return jnp.concatenate([atom_rep, frag_rep], axis=1)     # pooling=None


# ----------------------------------------------------------------------------
# Pure-JAX references (mirror the bf16-operand / f32-accumulate math).
# ----------------------------------------------------------------------------
def _gru_forward_last_ref(x, p):
    H = x.shape[-1]
    wi = p["wi"].astype(jnp.bfloat16)
    wh = p["wh"].astype(jnp.bfloat16)

    def step(h, xt):
        xg = jnp.dot(xt.astype(jnp.bfloat16), wi, preferred_element_type=jnp.float32) + p["bi"]
        hg = jnp.dot(h.astype(jnp.bfloat16), wh, preferred_element_type=jnp.float32) + p["bh"]
        r = jax.nn.sigmoid(xg[:, :H] + hg[:, :H])
        z = jax.nn.sigmoid(xg[:, H:2 * H] + hg[:, H:2 * H])
        n = jnp.tanh(xg[:, 2 * H:] + r * hg[:, 2 * H:])
        return (1.0 - z) * n + z * h, None

    h0 = jnp.zeros((x.shape[0], H), jnp.float32)
    h, _ = lax.scan(step, h0, jnp.transpose(x, (1, 0, 2)))
    return h


def _gru_reverse_at_last_ref(x, p):
    H = x.shape[-1]
    xg = jnp.dot(x[:, -1, :].astype(jnp.bfloat16), p["wi"].astype(jnp.bfloat16),
                 preferred_element_type=jnp.float32) + p["bi"]
    bh = p["bh"]
    r = jax.nn.sigmoid(xg[:, :H] + bh[:, :H])
    z = jax.nn.sigmoid(xg[:, H:2 * H] + bh[:, H:2 * H])
    n = jnp.tanh(xg[:, 2 * H:] + r * bh[:, 2 * H:])
    return (1.0 - z) * n


def _node_gru_ref(params, atom_rep, frag_rep):
    a_fwd = _gru_forward_last_ref(atom_rep, params["atom_fwd"])
    a_bwd = _gru_reverse_at_last_ref(atom_rep, params["atom_rev"])
    f_fwd = _gru_forward_last_ref(frag_rep, params["frag_fwd"])
    f_bwd = _gru_reverse_at_last_ref(frag_rep, params["frag_rev"])
    embed = jnp.concatenate([a_fwd, a_bwd, f_fwd, f_bwd], axis=1)
    return (jnp.dot(embed.astype(jnp.bfloat16), params["proj_w"].astype(jnp.bfloat16),
                    preferred_element_type=jnp.float32) + params["proj_b"])


if __name__ == "__main__":
    B, La, Lf, H = 2, 16, 8, 300  # e.g. atom_rep [2, 16, 300], frag_rep [2, 8, 300]
    key = jax.random.PRNGKey(0)
    k_a, k_f, k_m = jax.random.split(key, 3)
    atom_rep = jax.random.normal(k_a, (B, La, H), jnp.float32)
    frag_rep = jax.random.normal(k_f, (B, Lf, H), jnp.float32)

    # Default module config: pooling='avg'.
    model_avg = PepLandFeatureExtractorPallas(hid_dim=H, pooling="avg")
    out_avg = jax.block_until_ready(model_avg(atom_rep, frag_rep))
    ref_avg = jnp.mean(jnp.concatenate([atom_rep, frag_rep], axis=1), axis=1)
    assert out_avg.shape == (B, H)
    assert jnp.allclose(out_avg, ref_avg, atol=1e-4, rtol=1e-4)

    # 'max' pooling branch.
    model_max = PepLandFeatureExtractorPallas(hid_dim=H, pooling="max")
    out_max = jax.block_until_ready(model_max(atom_rep, frag_rep))
    ref_max = jnp.max(jnp.concatenate([atom_rep, frag_rep], axis=1), axis=1)
    assert out_max.shape == (B, H)
    assert jnp.allclose(out_max, ref_max, atol=1e-4, rtol=1e-4)

    # Odd (non-8-multiple) shapes exercise the cdiv grid + masked-tail pooling path.
    a_odd = jax.random.normal(jax.random.PRNGKey(1), (3, 13, H), jnp.float32)
    f_odd = jax.random.normal(jax.random.PRNGKey(2), (3, 5, H), jnp.float32)
    out_odd_max = jax.block_until_ready(pooled_embed(a_odd, f_odd, mode="max",
                                                     max_seq_tile=8))
    ref_odd_max = jnp.max(jnp.concatenate([a_odd, f_odd], axis=1), axis=1)
    assert jnp.allclose(out_odd_max, ref_odd_max, atol=1e-4, rtol=1e-4)
    out_odd_avg = jax.block_until_ready(pooled_embed(a_odd, f_odd, mode="avg",
                                                     max_seq_tile=8))
    ref_odd_avg = jnp.mean(jnp.concatenate([a_odd, f_odd], axis=1), axis=1)
    assert jnp.allclose(out_odd_avg, ref_odd_avg, atol=1e-4, rtol=1e-4)

    # 'gru' pooling branch (fused Node_GRU readout).
    model_gru = PepLandFeatureExtractorPallas(hid_dim=H, pooling="gru", key=k_m)
    out_gru = jax.block_until_ready(model_gru(atom_rep, frag_rep))
    ref_gru = _node_gru_ref(model_gru.gru.params, atom_rep, frag_rep)
    assert out_gru.shape == (B, H)
    assert jnp.allclose(out_gru, ref_gru, atol=1e-2, rtol=1e-2), \
        float(jnp.max(jnp.abs(out_gru - ref_gru)))

    # atom_index path (glue gather, matches atom_rep[:, atom_index]).
    out_idx = jax.block_until_ready(model_avg(atom_rep, frag_rep, atom_index=[1, 2]))
    assert out_idx.shape == (B, 2, H)
    assert jnp.allclose(out_idx, atom_rep[:, jnp.array([1, 2])])

    print("KERNEL_OK")
</pallas_src>

<mosaic_0001>
module attributes {stable_mosaic.version = 11 : i64} {
  func.func @_pool_kernel(%arg0: i32, %arg1: i32, %arg2: memref<2x16x300xf32, #tpu.memory_space<vmem>>, %arg3: memref<2x8x300xf32, #tpu.memory_space<vmem>>, %arg4: memref<2x300xf32, #tpu.memory_space<vmem>>) attributes {dimension_semantics = [#tpu.dimension_semantics<parallel>, #tpu.dimension_semantics<arbitrary>], iteration_bounds = array<i64: 1, 2>, scalar_prefetch = 0 : i64, scratch_operands = 0 : i64, tpu.core_type = #tpu.core_type<tc>, window_params = [{transform_indices = @transform_0, window_bounds = array<i64: 2, 16, 300>}, {transform_indices = @transform_1, window_bounds = array<i64: 2, 8, 300>}, {transform_indices = @transform_2, window_bounds = array<i64: 2, 300>}]} {
    %c0_i32 = arith.constant 0 : i32
    %0 = arith.cmpi eq, %arg1, %c0_i32 : i32
    %1 = arith.extui %0 : i1 to i32
    %c0_i32_0 = arith.constant 0 : i32
    %2 = arith.cmpi ne, %1, %c0_i32_0 : i32
    scf.if %2 {
      %cst = arith.constant 0.000000e+00 : f32
      %12 = vector.broadcast %cst : f32 to vector<2x300xf32>
      %c0 = arith.constant 0 : index
      %c0_6 = arith.constant 0 : index
      %13 = vector.load %arg4[%c0, %c0_6] : memref<2x300xf32, #tpu.memory_space<vmem>>, vector<2x300xf32>
      tpu.vector_store %arg4[%c0, %c0_6], %12 {strides = array<i32>} : memref<2x300xf32, #tpu.memory_space<vmem>>, vector<2x300xf32>,
    } else {
    }
    %c1_i32 = arith.constant 1 : i32
    %3 = arith.cmpi slt, %arg1, %c1_i32 : i32
    %4 = arith.extui %3 : i1 to i32
    %c0_i32_1 = arith.constant 0 : i32
    %5 = arith.cmpi ne, %4, %c0_i32_1 : i32
    scf.if %5 {
      %c0 = arith.constant 0 : index
      %c0_6 = arith.constant 0 : index
      %c0_7 = arith.constant 0 : index
      %12 = vector.load %arg2[%c0, %c0_6, %c0_7] : memref<2x16x300xf32, #tpu.memory_space<vmem>>, vector<2x16x300xf32>
      %c0_8 = arith.constant 0 : index
      %c0_9 = arith.constant 0 : index
      %13 = vector.load %arg4[%c0_8, %c0_9] : memref<2x300xf32, #tpu.memory_space<vmem>>, vector<2x300xf32>
      %cst = arith.constant dense<0.000000e+00> : vector<2x300xf32>
      %14 = vector.multi_reduction <add>, %12, %cst [1] : vector<2x16x300xf32> to vector<2x300xf32>
      %15 = arith.addf %13, %14 : vector<2x300xf32>
      %c0_10 = arith.constant 0 : index
      %c0_11 = arith.constant 0 : index
      %16 = vector.load %arg4[%c0_10, %c0_11] : memref<2x300xf32, #tpu.memory_space<vmem>>, vector<2x300xf32>
      tpu.vector_store %arg4[%c0_10, %c0_11], %15 {strides = array<i32>} : memref<2x300xf32, #tpu.memory_space<vmem>>, vector<2x300xf32>,
    } else {
    }
    %c1_i32_2 = arith.constant 1 : i32
    %6 = arith.cmpi sge, %arg1, %c1_i32_2 : i32
    %7 = arith.extui %6 : i1 to i32
    %c0_i32_3 = arith.constant 0 : i32
    %8 = arith.cmpi ne, %7, %c0_i32_3 : i32
    scf.if %8 {
      %c0 = arith.constant 0 : index
      %c0_6 = arith.constant 0 : index
      %c0_7 = arith.constant 0 : index
      %12 = vector.load %arg3[%c0, %c0_6, %c0_7] : memref<2x8x300xf32, #tpu.memory_space<vmem>>, vector<2x8x300xf32>
      %c0_8 = arith.constant 0 : index
      %c0_9 = arith.constant 0 : index
      %13 = vector.load %arg4[%c0_8, %c0_9] : memref<2x300xf32, #tpu.memory_space<vmem>>, vector<2x300xf32>
      %cst = arith.constant dense<0.000000e+00> : vector<2x300xf32>
      %14 = vector.multi_reduction <add>, %12, %cst [1] : vector<2x8x300xf32> to vector<2x300xf32>
      %15 = arith.addf %13, %14 : vector<2x300xf32>
      %c0_10 = arith.constant 0 : index
      %c0_11 = arith.constant 0 : index
      %16 = vector.load %arg4[%c0_10, %c0_11] : memref<2x300xf32, #tpu.memory_space<vmem>>, vector<2x300xf32>
      tpu.vector_store %arg4[%c0_10, %c0_11], %15 {strides = array<i32>} : memref<2x300xf32, #tpu.memory_space<vmem>>, vector<2x300xf32>,
    } else {
    }
    %c1_i32_4 = arith.constant 1 : i32
    %9 = arith.cmpi eq, %arg1, %c1_i32_4 : i32
    %10 = arith.extui %9 : i1 to i32
    %c0_i32_5 = arith.constant 0 : i32
    %11 = arith.cmpi ne, %10, %c0_i32_5 : i32
    scf.if %11 {
      %c0 = arith.constant 0 : index
      %c0_6 = arith.constant 0 : index
      %12 = vector.load %arg4[%c0, %c0_6] : memref<2x300xf32, #tpu.memory_space<vmem>>, vector<2x300xf32>
      %cst = arith.constant 0.0416666679 : f32
      %13 = vector.broadcast %cst : f32 to vector<2x300xf32>
      %14 = arith.mulf %12, %13 : vector<2x300xf32>
      %c0_7 = arith.constant 0 : index
      %c0_8 = arith.constant 0 : index
      %15 = vector.load %arg4[%c0_7, %c0_8] : memref<2x300xf32, #tpu.memory_space<vmem>>, vector<2x300xf32>
      tpu.vector_store %arg4[%c0_7, %c0_8], %14 {strides = array<i32>} : memref<2x300xf32, #tpu.memory_space<vmem>>, vector<2x300xf32>,
    } else {
    }
    return
  }
  func.func @transform_0(%arg0: i32, %arg1: i32) -> (i32, i32, i32) {
    %c0_i32 = arith.constant 0 : i32
    %0 = arith.minsi %arg1, %c0_i32 : i32
    %c0_i32_0 = arith.constant 0 : i32
    %c0_i32_1 = arith.constant 0 : i32
    return %arg0, %0, %c0_i32_0 : i32, i32, i32
  }
  func.func @transform_1(%arg0: i32, %arg1: i32) -> (i32, i32, i32) {
    %c1_i32 = arith.constant 1 : i32
    %0 = arith.subi %arg1, %c1_i32 : i32
    %c0_i32 = arith.constant 0 : i32
    %1 = arith.maxsi %0, %c0_i32 : i32
    %c0_i32_0 = arith.constant 0 : i32
    %c0_i32_1 = arith.constant 0 : i32
    return %arg0, %1, %c0_i32_0 : i32, i32, i32
  }
  func.func @transform_2(%arg0: i32, %arg1: i32) -> (i32, i32) {
    %c0_i32 = arith.constant 0 : i32
    %c0_i32_0 = arith.constant 0 : i32
    return %arg0, %c0_i32 : i32, i32
  }
}

</mosaic_0001>

<llo_original>
// kernel: tpu_custom_call.1
$region0: #{tpu_custom_call.1}
  #allocation0 [shape = 'u32[]', space=smem, size = 0x4, offset = 0x4, fixed_abs, tag = 'smem constant byte address 0x4 - core index']
  #allocation1 [shape = 'u32[72,128]{1,0:T(1,128)}', space=vmem, size = 0x9000, scoped, tag = 'internal scratch']
  %s0 = inlined_call_operand.hbm [shape: f32[2,16,300], index: 0, kind: input, shape index: {}]
  %s1 = inlined_call_operand.hbm [shape: f32[2,8,300], index: 1, kind: input, shape index: {}]
  %s2 = inlined_call_operand.hbm [shape: f32[2,300], index: 2, kind: output, shape index: {}]
  %s3 = sld [smem:[#allocation0]]
  $region65: #{tpu_custom_call.1} parent=0
    _
  %s5 = ssub.s32 1, %s3
  %s6 = scalar_select 0, %s5, %s3
  $region1: #{tpu_custom_call.1} parent=0
    #allocation2 [shape = 'u8[98304]{0}', space=vmem, size = 0x18000, scoped, tag = 'input window, operand 0']
    #allocation3 [shape = 's32[2]{0}', space=sflag, size = 0x8, scoped, tag = 'scoped memory for tpu_custom_call.1']
    #allocation4 [shape = 's32[2]{0}', space=sflag, size = 0x8, scoped, tag = 'scoped memory for tpu_custom_call.1']
    #allocation5 [shape = 'u8[49152]{0}', space=vmem, size = 0xc000, scoped, tag = 'input window, operand 1']
    #allocation6 [shape = 's32[2]{0}', space=sflag, size = 0x8, scoped, tag = 'scoped memory for tpu_custom_call.1']
    #allocation7 [shape = 'u8[3072]{0}', space=vmem, size = 0xc00, scoped, tag = 'output window, operand 0, single buffered']
    %7 = vsyncpa [#allocation3], 0
    %s8 = scalar_lea.sflag [#allocation3], 1
    %9 = vsyncpa %s8, 0
    %10 = vsyncpa [#allocation6], 0
    %s11 = scalar_lea.sflag [#allocation6], 1
    %12 = vsyncpa %s11, 0
    %13 = vsyncpa [#allocation4], 0
    loop: start=0, step=1, limit=4
    $region2: #{tpu_custom_call.1} parent=1 // loop_pre_header
      _
    $region3: #{tpu_custom_call.1} parent=1 // loop_header
      %s15 = sphi 0, %s19
      %p16 = scmp.ge.s32.totalorder %s15, 4
      %s22 = sphi 0, %s34
      %s23 = sphi 0, %s30
      %s24 = sphi 0, %s22
      %s25 = sphi 0, %s23
      %s26 = sphi 0, %s24
      %s27 = sphi 0, %s25
      %s43 = sphi 0, %s45
      %s46 = sphi 0, %s43
      %s47 = sphi 0, %s46
      %s63 = sphi 0, %s47
      %s77 = sphi 0, %s79
      %s80 = sphi 0, %s77
      %s81 = sphi 0, %s80
      %s97 = sphi 0, %s81
      %s103 = sphi 0, %s105
      %s106 = sphi 0, %s103
      %s107 = sphi 0, %s106
      %s123 = sphi 0, %s107
    $region4: #{tpu_custom_call.1} parent=1 // loop_header_branch
      %18 = sbr.rel (%p16) target = $region8
    $region5: #{tpu_custom_call.1} parent=1 // loop_body
      %s20 = ssub.s32 %s15, 1
      %s21 = ssub.s32 %s15, 2
      %s28 = sadd.s32 1, %s23
      %p29 = scmp.ge.s32.totalorder %s28, 2
      %s30 = scalar_select %p29, 0, %s28
      %s31 = sadd.s32 1, %s22
      %s32 = scalar_select %p29, %s31, %s22
      %p33 = scmp.ge.s32.totalorder %s32, 1
      %s34 = scalar_select %p33, 0, %s32
      %p35 = scmp.lt.s32.totalorder %s23, 0
      %s36 = scalar_select %p35, %s23, 0
      %p37 = scmp.lt.s32.totalorder %s30, 0
      %s38 = scalar_select %p37, %s30, 0
      %s39 = ssub.s32 %s22, %s34
      %s40 = ssub.s32 %s36, %s38
      %s41 = sor.u32 %s39, %s40
      %p42 = scmp.eq.s32.totalorder %s41, 0
      %s44 = sadd.s32 %s43, 1
      %s45 = scalar_select %p42, %s43, %s44
      %p48 = pneg %p42
      %p49 = scmp.eq.s32.totalorder %s15, 1
      %p50 = por %p48, %p49
      %p51 = scmp.ne.s32.totalorder %s43, %s46
      %p52 = scmp.eq.s32.totalorder %s15, 0
      %p53 = por %p51, %p52
      %p54 = scmp.ne.s32.totalorder %s43, %s46
      %p55 = scmp.eq.s32.totalorder %s20, 1
      %p56 = por %p54, %p55
      %p57 = scmp.ne.s32.totalorder %s46, %s47
      %p58 = scmp.eq.s32.totalorder %s20, 0
      %p59 = por %p57, %p58
      %p60 = scmp.ne.s32.totalorder %s46, %s47
      %p61 = scmp.eq.s32.totalorder %s21, 1
      %p62 = por %p60, %p61
      %p64 = scmp.ne.s32.totalorder %s47, %s63
      %p65 = scmp.eq.s32.totalorder %s21, 0
      %p66 = por %p64, %p65
      %s67 = ssub.s32 %s23, 1
      %p68 = scmp.gt.s32.totalorder %s67, 0
      %s69 = scalar_select %p68, %s67, 0
      %s70 = ssub.s32 %s30, 1
      %p71 = scmp.gt.s32.totalorder %s70, 0
      %s72 = scalar_select %p71, %s70, 0
      %s73 = ssub.s32 %s22, %s34
      %s74 = ssub.s32 %s69, %s72
      %s75 = sor.u32 %s73, %s74
      %p76 = scmp.eq.s32.totalorder %s75, 0
      %s78 = sadd.s32 %s77, 1
      %s79 = scalar_select %p76, %s77, %s78
      %p82 = pneg %p76
      %p83 = scmp.eq.s32.totalorder %s15, 1
      %p84 = por %p82, %p83
      %p85 = scmp.ne.s32.totalorder %s77, %s80
      %p86 = scmp.eq.s32.totalorder %s15, 0
      %p87 = por %p85, %p86
      %p88 = scmp.ne.s32.totalorder %s77, %s80
      %p89 = scmp.eq.s32.totalorder %s20, 1
      %p90 = por %p88, %p89
      %p91 = scmp.ne.s32.totalorder %s80, %s81
      %p92 = scmp.eq.s32.totalorder %s20, 0
      %p93 = por %p91, %p92
      %p94 = scmp.ne.s32.totalorder %s80, %s81
      %p95 = scmp.eq.s32.totalorder %s21, 1
      %p96 = por %p94, %p95
      %p98 = scmp.ne.s32.totalorder %s81, %s97
      %p99 = scmp.eq.s32.totalorder %s21, 0
      %p100 = por %p98, %p99
      %s101 = ssub.s32 %s22, %s34
      %p102 = scmp.eq.s32.totalorder %s101, 0
      %s104 = sadd.s32 %s103, 1
      %s105 = scalar_select %p102, %s103, %s104
      %p108 = pneg %p102
      %p109 = scmp.eq.s32.totalorder %s15, 1
      %p110 = por %p108, %p109
      %p111 = scmp.ne.s32.totalorder %s103, %s106
      %p112 = scmp.eq.s32.totalorder %s15, 0
      %p113 = por %p111, %p112
      %p114 = scmp.ne.s32.totalorder %s103, %s106
      %p115 = scmp.eq.s32.totalorder %s20, 1
      %p116 = por %p114, %p115
      %p117 = scmp.ne.s32.totalorder %s106, %s107
      %p118 = scmp.eq.s32.totalorder %s20, 0
      %p119 = por %p117, %p118
      %p120 = scmp.ne.s32.totalorder %s106, %s107
      %p121 = scmp.eq.s32.totalorder %s21, 1
      %p122 = por %p120, %p121
      %p124 = scmp.ne.s32.totalorder %s107, %s123
      %p125 = scmp.eq.s32.totalorder %s21, 0
      %p126 = por %p124, %p125
      %p127 = scmp.le.s32.totalorder 1, %s15
      %p128 = scmp.lt.s32.totalorder %s15, 3
      %p129 = pnand %p127, %p128
      %p130 = pneg %p129
      // Predicated region
      $region9: #{tpu_custom_call.1} parent=5 // pred_check
        _
      $region10: #{tpu_custom_call.1} parent=5 // pred_check_branch
        %132 = sbr.rel (%p129) target = $region12
      $region11: #{tpu_custom_call.1} parent=5 // pred_region
        %s133 = ssub.s32 %s15, 1
      $region12: #{tpu_custom_call.1} parent=5 // pred_fallthru
        _
      %p134 = scmp.lt.s32.totalorder %s15, 2
      // Predicated region
      $region13: #{tpu_custom_call.1} parent=5 // pred_check
        %p135 = pneg %p134
      $region14: #{tpu_custom_call.1} parent=5 // pred_check_branch
        %137 = sbr.rel (%p135) target = $region16
      $region15: #{tpu_custom_call.1} parent=5 // pred_region
        // Predicated region
        $region17: #{tpu_custom_call.1} parent=15 // pred_check
          %p138 = pneg %p53
        $region18: #{tpu_custom_call.1} parent=15 // pred_check_branch
          %140 = sbr.rel (%p138) target = $region20
        $region19: #{tpu_custom_call.1} parent=15 // pred_region
          %s141 = sand.u32 %s43, 1
          %s142 = scalar_lea.sflag [#allocation3], %s141
          %s143 = sand.u32 %s43, 1
          %s144 = smul.addr %s143, 96
          %s145 = scalar_lea.vmem [#allocation2], %s144
          %p146 = scmp.lt.s32.totalorder %s23, 0
          %s147 = scalar_select %p146, %s23, 0
          %s148 = smul.u32 2, %s22
          %s149 = smul.u32 2, %s147
          %151 = vsyncadd %s142, 0
          %s152 = smul.addr %s149, 3
          %s153 = smul.addr %s148, 6
          %s154 = sadd.s32 %s152, %s153
          %s155 = smul.addr %s154, 8
          %s156 = scalar_lea.hbm %s0, %s155
          %s157 = sshll.u32 %s156, 4
          %s158 = int_to_ptr.hbm [resolvable:$true] %s157
          %s159 = sshll.u32 %s145, 4
          %s160 = int_to_ptr.vmem [resolvable:$true] %s159
          %165 = dma.hbm_to_vmem [thread:$0]  %s158, 1536, %s160, %s142, 384, 384, 24
        $region20: #{tpu_custom_call.1} parent=15 // pred_fallthru
          _
        // Predicated region
        $region21: #{tpu_custom_call.1} parent=15 // pred_check
          %p166 = pneg %p87
        $region22: #{tpu_custom_call.1} parent=15 // pred_check_branch
          %168 = sbr.rel (%p166) target = $region24
        $region23: #{tpu_custom_call.1} parent=15 // pred_region
          %s169 = sand.u32 %s77, 1
          %s170 = scalar_lea.sflag [#allocation6], %s169
          %s171 = sand.u32 %s77, 1
          %s172 = smul.addr %s171, 48
          %s173 = scalar_lea.vmem [#allocation5], %s172
          %s174 = ssub.s32 %s23, 1
          %p175 = scmp.gt.s32.totalorder %s174, 0
          %s176 = scalar_select %p175, %s174, 0
          %s177 = smul.u32 2, %s22
          %179 = vsyncadd %s170, 0
          %s180 = smul.addr %s176, 3
          %s181 = smul.addr %s177, 3
          %s182 = sadd.s32 %s180, %s181
          %s183 = smul.addr %s182, 8
          %s184 = scalar_lea.hbm %s1, %s183
          %s185 = sshll.u32 %s184, 4
          %s186 = int_to_ptr.hbm [resolvable:$true] %s185
          %s187 = sshll.u32 %s173, 4
          %s188 = int_to_ptr.vmem [resolvable:$true] %s187
          %193 = dma.hbm_to_vmem [thread:$0]  %s186, 768, %s188, %s170, 384, 384, 24
        $region24: #{tpu_custom_call.1} parent=15 // pred_fallthru
          _
      $region16: #{tpu_custom_call.1} parent=5 // pred_fallthru
        _
      %p194 = scmp.le.s32.totalorder 1, %s15
      %p195 = scmp.lt.s32.totalorder %s15, 3
      %p196 = pnand %p194, %p195
      %p197 = pneg %p196
      // Predicated region
      $region25: #{tpu_custom_call.1} parent=5 // pred_check
        _
      $region26: #{tpu_custom_call.1} parent=5 // pred_check_branch
        %199 = sbr.rel (%p196) target = $region28
      $region27: #{tpu_custom_call.1} parent=5 // pred_region
        %s200 = ssub.s32 %s15, 1
        %s201 = sand.u32 %s46, 1
        %s202 = scalar_lea.sflag [#allocation3], %s201
        %s203 = sand.u32 %s46, 1
        %s204 = smul.addr %s203, 96
        %s205 = scalar_lea.vmem [#allocation2], %s204
        // Predicated region
        $region29: #{tpu_custom_call.1} parent=27 // pred_check
          %p206 = pneg %p59
        $region30: #{tpu_custom_call.1} parent=27 // pred_check_branch
          %208 = sbr.rel (%p206) target = $region32
        $region31: #{tpu_custom_call.1} parent=27 // pred_region
          %210 = dma.done %s202, 1536
        $region32: #{tpu_custom_call.1} parent=27 // pred_fallthru
          _
        %s211 = sand.u32 %s80, 1
        %s212 = scalar_lea.sflag [#allocation6], %s211
        %s213 = sand.u32 %s80, 1
        %s214 = smul.addr %s213, 48
        %s215 = scalar_lea.vmem [#allocation5], %s214
        // Predicated region
        $region33: #{tpu_custom_call.1} parent=27 // pred_check
          %p216 = pneg %p93
        $region34: #{tpu_custom_call.1} parent=27 // pred_check_branch
          %218 = sbr.rel (%p216) target = $region36
        $region35: #{tpu_custom_call.1} parent=27 // pred_region
          %220 = dma.done %s212, 768
        $region36: #{tpu_custom_call.1} parent=27 // pred_fallthru
          _
        %s221 = sand.u32 %s46, 1
        %s222 = scalar_lea.sflag [#allocation3], %s221
        %s223 = sand.u32 %s46, 1
        %s224 = smul.addr %s223, 96
        %s225 = scalar_lea.vmem [#allocation2], %s224
        %p226 = pneg %p59
        %p227 = pneg %p56
        %s228 = sand.u32 %s80, 1
        %s229 = scalar_lea.sflag [#allocation6], %s228
        %s230 = sand.u32 %s80, 1
        %s231 = smul.addr %s230, 48
        %s232 = scalar_lea.vmem [#allocation5], %s231
        %p233 = pneg %p93
        %p234 = pneg %p90
        %p235 = pneg %p119
        %p236 = pneg %p116
        %p237 = scmp.lt.s32.totalorder %s25, 0
        %s238 = scalar_select %p237, %s25, 0
        %s239 = smul.u32 2, %s24
        %s240 = smul.u32 2, %s238
        %s241 = ssub.s32 %s25, 1
        %p242 = scmp.gt.s32.totalorder %s241, 0
        %s243 = scalar_select %p242, %s241, 0
        %s244 = smul.u32 2, %s24
        %p245 = scmp.eq.s32.totalorder %s25, 0
        // Predicated region
        $region37: #{tpu_custom_call.1} parent=27 // pred_check
          %p246 = pneg %p245
        $region38: #{tpu_custom_call.1} parent=27 // pred_check_branch
          %248 = sbr.rel (%p246) target = $region40
        $region39: #{tpu_custom_call.1} parent=27 // pred_region
          %vm249 = vcmask 1041408
          %vm250 = vcmask 1043458
          %vm251 = vmor %vm250, %vm249
          %vm252 = vcmask 357380
          %vm253 = vmor %vm252, %vm251
          %254 = vst.msk [vmem:[#allocation7] sm:$0x3f] %vm253, 0.0
        $region40: #{tpu_custom_call.1} parent=27 // pred_fallthru
          _
        %p255 = scmp.lt.s32.totalorder %s25, 1
        // Predicated region
        $region41: #{tpu_custom_call.1} parent=27 // pred_check
          %p256 = pneg %p255
        $region42: #{tpu_custom_call.1} parent=27 // pred_check_branch
          %258 = sbr.rel (%p256) target = $region44
        $region43: #{tpu_custom_call.1} parent=27 // pred_region
          %v259 = vld [vmem:[%s205] sm:$0xff]
          %v260 = vld [vmem:[%s205 + $0x8] sm:$0xff]
          %v261 = vld [vmem:[%s205 + $0x10] sm:$0xff]
          %v262 = vld [vmem:[%s205 + $0x18] sm:$0xff]
          %v263 = vld [vmem:[%s205 + $0x20] sm:$0xff]
          %v264 = vld [vmem:[%s205 + $0x28] sm:$0xff]
          %v265 = vld [vmem:[%s205 + $0x30] sm:$0xff]
          %v266 = vld [vmem:[%s205 + $0x38] sm:$0xff]
          %v267 = vld [vmem:[%s205 + $0x40] sm:$0xff]
          %v268 = vld [vmem:[%s205 + $0x48] sm:$0xff]
          %v269 = vld [vmem:[%s205 + $0x50] sm:$0xff]
          %v270 = vld [vmem:[%s205 + $0x58] sm:$0xff]
          %v271 = vld [vmem:[#allocation7] sm:$0x3f]
          %v272 = vadd.f32 %v259, %v262
          %v273 = vrot.slane %v272, 4
          %v274 = vadd.f32 %v272, %v273
          %v275 = vrot.slane %v274, 2
          %v276 = vadd.f32 %v274, %v275
          %v277 = vrot.slane %v276, 1
          %v278 = vadd.f32 %v276, %v277
          %v279 = vadd.f32 %v260, %v263
          %v280 = vrot.slane %v279, 4
          %v281 = vadd.f32 %v279, %v280
          %v282 = vrot.slane %v281, 2
          %v283 = vadd.f32 %v281, %v282
          %v284 = vrot.slane %v283, 1
          %v285 = vadd.f32 %v283, %v284
          %vm286 = vcmask 359424
          %v287 = vsel %vm286, %v261, 0.0
          %v288 = vsel %vm286, %v264, 0.0
          %v289 = vadd.f32 %v287, %v288
          %v290 = vrot.slane %v289, 4
          %v291 = vadd.f32 %v289, %v290
          %v292 = vrot.slane %v291, 2
          %v293 = vadd.f32 %v291, %v292
          %v294 = vrot.slane %v293, 1
          %v295 = vadd.f32 %v293, %v294
          %v296 = vadd.f32 %v265, %v268
          %v297 = vrot.slane %v296, 4
          %v298 = vadd.f32 %v296, %v297
          %v299 = vrot.slane %v298, 2
          %v300 = vadd.f32 %v298, %v299
          %v301 = vrot.slane %v300, 1
          %v302 = vadd.f32 %v300, %v301
          %v303 = vadd.f32 %v266, %v269
          %v304 = vrot.slane %v303, 4
          %v305 = vadd.f32 %v303, %v304
          %v306 = vrot.slane %v305, 2
          %v307 = vadd.f32 %v305, %v306
          %v308 = vrot.slane %v307, 1
          %v309 = vadd.f32 %v307, %v308
          %v310 = vsel %vm286, %v267, 0.0
          %v311 = vsel %vm286, %v270, 0.0
          %v312 = vadd.f32 %v310, %v311
          %v313 = vrot.slane %v312, 4
          %v314 = vadd.f32 %v312, %v313
          %v315 = vrot.slane %v314, 2
          %v316 = vadd.f32 %v314, %v315
          %v317 = vrot.slane %v316, 1
          %v318 = vadd.f32 %v316, %v317
          %v325 = vrot.slane %v285, 6
          %v326 = vrot.slane %v295, 4
          %v327 = vrot.slane %v309, 6
          %v328 = vrot.slane %v318, 4
          %vm329 = vcmask 1041408
          %v330 = vsel %vm329, %v278, %v325
          %vm331 = vcmask 1043456
          %v332 = vsel %vm331, %v330, %v326
          %v333 = vsel %vm329, %v302, %v327
          %v334 = vsel %vm331, %v333, %v328
          %vm335 = vcmask 1044484
          %v336 = vsel %vm335, %v332, %v332
          %vm337 = vcmask 1046534
          %v338 = vsel %vm337, %v332, %v336
          %v339 = vrot.slane %v334, 7
          %vm340 = vcmask 1041409
          %v341 = vsel %vm340, %v339, %v338
          %vm342 = vcmask 1043459
          %v343 = vsel %vm342, %v339, %v341
          %vm344 = vcmask 1045509
          %v345 = vsel %vm344, %v339, %v343
          %vm346 = vcmask 1047559
          %v347 = vsel %vm346, %v339, %v345
          %v349 = vadd.f32 %v271, %v347
          %vm350 = vcmask 1043458
          %vm351 = vmor %vm350, %vm329
          %vm352 = vcmask 357380
          %vm353 = vmor %vm352, %vm351
          %354 = vst.msk [vmem:[#allocation7] sm:$0x3f] %vm353, %v349
        $region44: #{tpu_custom_call.1} parent=27 // pred_fallthru
          _
        %p355 = scmp.ge.s32.totalorder %s25, 1
        // Predicated region
        $region45: #{tpu_custom_call.1} parent=27 // pred_check
          %p356 = pneg %p355
        $region46: #{tpu_custom_call.1} parent=27 // pred_check_branch
          %358 = sbr.rel (%p356) target = $region48
        $region47: #{tpu_custom_call.1} parent=27 // pred_region
          %v359 = vld [vmem:[%s215] sm:$0xff]
          %v360 = vld [vmem:[%s215 + $0x8] sm:$0xff]
          %v361 = vld [vmem:[%s215 + $0x10] sm:$0xff]
          %v362 = vld [vmem:[%s215 + $0x18] sm:$0xff]
          %v363 = vld [vmem:[%s215 + $0x20] sm:$0xff]
          %v364 = vld [vmem:[%s215 + $0x28] sm:$0xff]
          %v365 = vld [vmem:[#allocation7] sm:$0x3f]
          %v366 = vrot.slane %v359, 4
          %v367 = vadd.f32 %v359, %v366
          %v368 = vrot.slane %v367, 2
          %v369 = vadd.f32 %v367, %v368
          %v370 = vrot.slane %v369, 1
          %v371 = vadd.f32 %v369, %v370
          %v372 = vrot.slane %v360, 4
          %v373 = vadd.f32 %v360, %v372
          %v374 = vrot.slane %v373, 2
          %v375 = vadd.f32 %v373, %v374
          %v376 = vrot.slane %v375, 1
          %v377 = vadd.f32 %v375, %v376
          %vm378 = vcmask 359424
          %v379 = vsel %vm378, %v361, 0.0
          %v380 = vrot.slane %v379, 4
          %v381 = vadd.f32 %v379, %v380
          %v382 = vrot.slane %v381, 2
          %v383 = vadd.f32 %v381, %v382
          %v384 = vrot.slane %v383, 1
          %v385 = vadd.f32 %v383, %v384
          %v386 = vrot.slane %v362, 4
          %v387 = vadd.f32 %v362, %v386
          %v388 = vrot.slane %v387, 2
          %v389 = vadd.f32 %v387, %v388
          %v390 = vrot.slane %v389, 1
          %v391 = vadd.f32 %v389, %v390
          %v392 = vrot.slane %v363, 4
          %v393 = vadd.f32 %v363, %v392
          %v394 = vrot.slane %v393, 2
          %v395 = vadd.f32 %v393, %v394
          %v396 = vrot.slane %v395, 1
          %v397 = vadd.f32 %v395, %v396
          %v398 = vsel %vm378, %v364, 0.0
          %v399 = vrot.slane %v398, 4
          %v400 = vadd.f32 %v398, %v399
          %v401 = vrot.slane %v400, 2
          %v402 = vadd.f32 %v400, %v401
          %v403 = vrot.slane %v402, 1
          %v404 = vadd.f32 %v402, %v403
          %v411 = vrot.slane %v377, 6
          %v412 = vrot.slane %v385, 4
          %v413 = vrot.slane %v397, 6
          %v414 = vrot.slane %v404, 4
          %vm415 = vcmask 1041408
          %v416 = vsel %vm415, %v371, %v411
          %vm417 = vcmask 1043456
          %v418 = vsel %vm417, %v416, %v412
          %v419 = vsel %vm415, %v391, %v413
          %v420 = vsel %vm417, %v419, %v414
          %vm421 = vcmask 1044484
          %v422 = vsel %vm421, %v418, %v418
          %vm423 = vcmask 1046534
          %v424 = vsel %vm423, %v418, %v422
          %v425 = vrot.slane %v420, 7
          %vm426 = vcmask 1041409
          %v427 = vsel %vm426, %v425, %v424
          %vm428 = vcmask 1043459
          %v429 = vsel %vm428, %v425, %v427
          %vm430 = vcmask 1045509
          %v431 = vsel %vm430, %v425, %v429
          %vm432 = vcmask 1047559
          %v433 = vsel %vm432, %v425, %v431
          %v435 = vadd.f32 %v365, %v433
          %vm436 = vcmask 1043458
          %vm437 = vmor %vm436, %vm415
          %vm438 = vcmask 357380
          %vm439 = vmor %vm438, %vm437
          %440 = vst.msk [vmem:[#allocation7] sm:$0x3f] %vm439, %v435
        $region48: #{tpu_custom_call.1} parent=27 // pred_fallthru
          _
        %p441 = scmp.eq.s32.totalorder %s25, 1
        // Predicated region
        $region49: #{tpu_custom_call.1} parent=27 // pred_check
          %p442 = pneg %p441
        $region50: #{tpu_custom_call.1} parent=27 // pred_check_branch
          %444 = sbr.rel (%p442) target = $region52
        $region51: #{tpu_custom_call.1} parent=27 // pred_region
          %v445 = vld [vmem:[#allocation7] sm:$0x3f]
          %v446 = vmul.f32 %v445, 0.041666668
          %vm447 = vcmask 1041408
          %vm448 = vcmask 1043458
          %vm449 = vmor %vm448, %vm447
          %vm450 = vcmask 357380
          %vm451 = vmor %vm450, %vm449
          %452 = vst.msk [vmem:[#allocation7] sm:$0x3f] %vm451, %v446
        $region52: #{tpu_custom_call.1} parent=27 // pred_fallthru
          _
        // Predicated region
        $region53: #{tpu_custom_call.1} parent=27 // pred_check
          %p453 = pneg %p116
        $region54: #{tpu_custom_call.1} parent=27 // pred_check_branch
          %455 = sbr.rel (%p453) target = $region56
        $region55: #{tpu_custom_call.1} parent=27 // pred_region
          %457 = vsyncadd [#allocation4], 0
          %s458 = smul.addr %s24, 3
          %s459 = smul.addr %s458, 2
          %s460 = scalar_lea.hbm %s2, %s459
          %s462 = sshll.u32 [#allocation7], 4
          %s463 = int_to_ptr.vmem [resolvable:$true] %s462
          %s464 = sshll.u32 %s460, 4
          %s465 = int_to_ptr.hbm [resolvable:$true] %s464
          %467 = dma.vmem_to_hbm [thread:$0]  %s463, 96, %s465, [#allocation4]
        $region56: #{tpu_custom_call.1} parent=27 // pred_fallthru
          _
        // Predicated region
        $region57: #{tpu_custom_call.1} parent=27 // pred_check
          %p468 = pneg %p116
        $region58: #{tpu_custom_call.1} parent=27 // pred_check_branch
          %470 = sbr.rel (%p468) target = $region60
        $region59: #{tpu_custom_call.1} parent=27 // pred_region
          %472 = dma.done [#allocation4], 96
        $region60: #{tpu_custom_call.1} parent=27 // pred_fallthru
          _
      $region28: #{tpu_custom_call.1} parent=5 // pred_fallthru
        _
      %p473 = scmp.le.s32.totalorder 2, %s15
      // Predicated region
      $region61: #{tpu_custom_call.1} parent=5 // pred_check
        %p474 = pneg %p473
      $region62: #{tpu_custom_call.1} parent=5 // pred_check_branch
        %476 = sbr.rel (%p474) target = $region64
      $region63: #{tpu_custom_call.1} parent=5 // pred_region
        %s477 = ssub.s32 %s15, 2
      $region64: #{tpu_custom_call.1} parent=5 // pred_fallthru
        _
    $region6: #{tpu_custom_call.1} parent=1 // loop_footer
      %s19 = sadd.s32 1, %s15
    $region7: #{tpu_custom_call.1} parent=1 // loop_footer_branch
      %14 = sbr.rel target = $region3
    $region8: #{tpu_custom_call.1} parent=1 // loop_exit
      _
    %478 = vsyncpa [#allocation3], 1
    %s479 = scalar_lea.sflag [#allocation3], 1
    %480 = vsyncpa %s479, 1
    %481 = vsyncpa [#allocation6], 1
    %s482 = scalar_lea.sflag [#allocation6], 1
    %483 = vsyncpa %s482, 1
    %484 = vsyncpa [#allocation4], 1
    %s485 = scalar_lea.sflag [#allocation4], 1
    %486 = vsyncpa %s485, 1

</llo_original>
